<compile_context>
chip_gen: v6e
topology: v6e:2x2x1
jax: 0.10.0
libtpu: 0.0.40
codegen_flags: <defaults>
</compile_context>

<pallas_src>
import functools

import jax
import jax.numpy as jnp
from jax.experimental import pallas as pl
from jax.experimental.pallas import tpu as pltpu


LANE = 128                       # TPU lane width
MAX_TILE_BYTES = 4 * 1024 * 1024  # target bytes per input block (per buffer)
_SUBLANE_PACK = {4: 8, 2: 16, 1: 32}  # itemsize -> native sublane packing


def _round_up(x, m):
    return (x + m - 1) // m * m


def _cdiv(a, b):
    return (a + b - 1) // b


def _dice_sums_kernel(p_ref, t_ref, out_ref, pt_acc, s_acc, *,
                      S, S_TILE, tiles_per_split, last_tile, ragged):
    """Accumulate per-row sum(p*t) and sum(p+t) over the spatial (k) axis."""
    k = pl.program_id(2)

    @pl.when(k == 0)
    def _init():
        pt_acc[...] = jnp.zeros_like(pt_acc)
        s_acc[...] = jnp.zeros_like(s_acc)

    def accumulate(mask_tail):
        # Cast to f32 inside the kernel (inputs may be bf16 / int masks) and
        # accumulate in f32 to avoid low-precision accumulation over large S.
        p = p_ref[...].astype(jnp.float32)
        t = t_ref[...].astype(jnp.float32)
        if mask_tail:
            # Only the last global spatial tile is ragged; valid column count
            # within it is a static int.
            n_valid = S - last_tile * S_TILE
            col = jax.lax.broadcasted_iota(jnp.int32, p_ref.shape, 1)
            valid = col < n_valid
            p = jnp.where(valid, p, 0.0)
            t = jnp.where(valid, t, 0.0)
        pt_acc[...] += jnp.sum(p * t, axis=1, keepdims=True)
        s_acc[...] += jnp.sum(p + t, axis=1, keepdims=True)

    if ragged:
        gk = pl.program_id(0) * tiles_per_split + k  # global spatial tile idx

        @pl.when(gk == last_tile)
        def _tail():
            accumulate(True)

        @pl.when(gk != last_tile)
        def _body():
            accumulate(False)
    else:
        accumulate(False)

    @pl.when(k == pl.num_programs(2) - 1)
    def _finalize():
        # Single lane-dense store: lane 0 = sum(p*t), lane 1 = sum(p)+sum(t).
        lane = jax.lax.broadcasted_iota(jnp.int32, out_ref.shape, 1)
        out_ref[...] = jnp.where(
            lane == 0, pt_acc[...],
            jnp.where(lane == 1, s_acc[...], 0.0))


@jax.jit
def dice_loss(pred, target):
    """Pallas implementation of DiceLoss.forward (pred/target: (B,C,D,H,W))."""
    assert pred.shape == target.shape and pred.ndim == 5
    B, C, D, H, W = pred.shape
    BC = B * C
    S = D * H * W

    # Flatten to rows (no-copy reshape of contiguous NCDHW), keep native dtype.
    p2 = pred.reshape(BC, S)
    t2 = target.reshape(BC, S)

    # Dtype-aware row blocking (match native sublane packing); don't over-block
    # a tiny BC.
    itemsizes = (jnp.dtype(p2.dtype).itemsize, jnp.dtype(t2.dtype).itemsize)
    row_block = max(_SUBLANE_PACK.get(i, 8) for i in itemsizes)
    row_block = min(row_block, _round_up(BC, 8))
    row_blocks = _cdiv(BC, row_block)

    # Balanced spatial tiling with a ~4 MiB per-block byte cap.
    max_item = max(itemsizes)
    cap = max(LANE, (MAX_TILE_BYTES // (row_block * max_item)) // LANE * LANE)
    S_lane = _round_up(S, LANE)
    ntiles = _cdiv(S_lane, cap)

    # On v7x, recover the 2nd TensorCore when BC is too small to fill the
    # parallel row axis, by splitting the spatial range in two.
    want_split = (row_blocks == 1) and (ntiles >= 2)
    if want_split:
        ntiles = _round_up(ntiles, 2)
    S_TILE = _round_up(_cdiv(S_lane, ntiles), LANE)
    ntiles = _cdiv(S_lane, S_TILE)
    split = 1
    if want_split and ntiles >= 2:
        nt2 = _round_up(ntiles, 2)
        if (nt2 - 1) * S_TILE < S:  # never schedule a fully out-of-bounds tile
            split, ntiles = 2, nt2
    tiles_per_split = ntiles // split
    ragged = (ntiles * S_TILE) != S
    last_tile = ntiles - 1

    grid = (split, row_blocks, tiles_per_split)

    kernel = functools.partial(
        _dice_sums_kernel,
        S=S, S_TILE=S_TILE, tiles_per_split=tiles_per_split,
        last_tile=last_tile, ragged=ragged)

    in_spec = pl.BlockSpec((row_block, S_TILE),
                           lambda s, i, k: (i, s * tiles_per_split + k))
    out_spec = pl.BlockSpec((row_block, LANE),
                            lambda s, i, k: (s * row_blocks + i, 0))

    sums = pl.pallas_call(
        kernel,
        out_shape=jax.ShapeDtypeStruct(
            (split * row_blocks * row_block, LANE), jnp.float32),
        grid_spec=pltpu.PrefetchScalarGridSpec(
            num_scalar_prefetch=0,
            grid=grid,
            in_specs=[in_spec, in_spec],
            out_specs=out_spec,
            scratch_shapes=[
                pltpu.VMEM((row_block, 1), jnp.float32),  # sum(p*t)
                pltpu.VMEM((row_block, 1), jnp.float32),  # sum(p) + sum(t)
            ],
        ),
        compiler_params=pltpu.CompilerParams(
            dimension_semantics=("parallel", "parallel", "arbitrary"),
            vmem_limit_bytes=48 * 1024 * 1024,
        ),
    )(p2, t2)

    # Glue: exact reproduction of the PyTorch scalar math.
    smooth = 1.0
    partial = sums.reshape(split, row_blocks * row_block, LANE)
    totals = jnp.sum(partial, axis=0)          # add the per-split partial sums
    tp = totals[:BC, 0].reshape(B, C)          # sum(p*t)
    spt = totals[:BC, 1].reshape(B, C)         # sum(p)+sum(t) == 2TP+FP+FN
    dice_per_bc = 2.0 * tp / (spt + smooth)    # (B, C)
    dice = jnp.sum(dice_per_bc, axis=1) / C    # (B,)
    diceloss = jnp.clip(jnp.mean(1.0 - dice), 0.0, 1.0)
    return diceloss


def _dice_loss_ref(pred, target):
    """Pure-JAX reference mirroring the PyTorch loop."""
    smooth = 1.0
    C = pred.shape[1]
    pred = pred.astype(jnp.float32)
    target = target.astype(jnp.float32)
    dice = 0.0
    for i in range(C):
        p = pred[:, i]
        t = target[:, i]
        TP = jnp.sum(p * t, axis=(1, 2, 3))
        FP = jnp.sum((1 - p) * t, axis=(1, 2, 3))
        FN = jnp.sum(p * (1 - t), axis=(1, 2, 3))
        dice = dice + 2 * TP / (2 * TP + FP + FN + smooth)
    dice = dice / C
    return jnp.clip(jnp.mean(1 - dice), 0.0, 1.0)


if __name__ == "__main__":
    key = jax.random.PRNGKey(0)
    k1, k2, k3, k4, k5, k6 = jax.random.split(key, 6)

    # Case 1: aligned shapes (no masking path). B=2, C=4, D=4, H=8, W=8.
    shape1 = (2, 4, 4, 8, 8)
    pred1 = jax.nn.sigmoid(jax.random.normal(k1, shape1, jnp.float32))
    targ1 = (jax.random.uniform(k2, shape1) > 0.5).astype(jnp.float32)
    loss1 = jax.block_until_ready(dice_loss(pred1, targ1))
    ref1 = jax.block_until_ready(_dice_loss_ref(pred1, targ1))
    assert jnp.allclose(loss1, ref1, atol=1e-4, rtol=1e-4), (loss1, ref1)

    # Case 2: ragged rows + ragged spatial tail (in-kernel mask path). BC=6, S=105.
    shape2 = (2, 3, 3, 5, 7)
    pred2 = jax.nn.sigmoid(jax.random.normal(k3, shape2, jnp.float32))
    targ2 = (jax.random.uniform(k4, shape2) > 0.5).astype(jnp.float32)
    loss2 = jax.block_until_ready(dice_loss(pred2, targ2))
    ref2 = jax.block_until_ready(_dice_loss_ref(pred2, targ2))
    assert jnp.allclose(loss2, ref2, atol=1e-4, rtol=1e-4), (loss2, ref2)

    # Case 3: small BC + large ragged S -> 2-way spatial split + masked tail.
    shape3 = (1, 2, 25, 60, 110)   # S = 165000
    pred3 = jax.nn.sigmoid(jax.random.normal(k5, shape3, jnp.float32))
    targ3 = (jax.random.uniform(k6, shape3) > 0.5).astype(jnp.float32)
    loss3 = jax.block_until_ready(dice_loss(pred3, targ3))
    ref3 = jax.block_until_ready(_dice_loss_ref(pred3, targ3))
    assert jnp.allclose(loss3, ref3, atol=1e-4, rtol=1e-4), (loss3, ref3)

    print("KERNEL_OK")
</pallas_src>

<mosaic_0001>
module attributes {stable_mosaic.version = 11 : i64} {
  func.func @_dice_sums_kernel(%arg0: i32, %arg1: i32, %arg2: i32, %arg3: memref<8x256xf32, #tpu.memory_space<vmem>>, %arg4: memref<8x256xf32, #tpu.memory_space<vmem>>, %arg5: memref<8x128xf32, #tpu.memory_space<vmem>>, %arg6: memref<8x1xf32, #tpu.memory_space<vmem>>, %arg7: memref<8x1xf32, #tpu.memory_space<vmem>>) attributes {dimension_semantics = [#tpu.dimension_semantics<parallel>, #tpu.dimension_semantics<parallel>, #tpu.dimension_semantics<arbitrary>], iteration_bounds = array<i64: 1, 1, 1>, scalar_prefetch = 0 : i64, scratch_operands = 2 : i64, tpu.core_type = #tpu.core_type<tc>, window_params = [{transform_indices = @transform_0, window_bounds = array<i64: 8, 256>}, {transform_indices = @transform_1, window_bounds = array<i64: 8, 256>}, {transform_indices = @transform_2, window_bounds = array<i64: 8, 128>}]} {
    %c0_i32 = arith.constant 0 : i32
    %0 = arith.cmpi eq, %arg2, %c0_i32 : i32
    %1 = arith.extui %0 : i1 to i32
    %c0_i32_0 = arith.constant 0 : i32
    %2 = arith.cmpi ne, %1, %c0_i32_0 : i32
    scf.if %2 {
      %cst_15 = arith.constant 0.000000e+00 : f32
      %20 = vector.broadcast %cst_15 : f32 to vector<8x1xf32>
      %c0_16 = arith.constant 0 : index
      %c0_17 = arith.constant 0 : index
      %21 = vector.load %arg6[%c0_16, %c0_17] : memref<8x1xf32, #tpu.memory_space<vmem>>, vector<8x1xf32>
      tpu.vector_store %arg6[%c0_16, %c0_17], %20 {strides = array<i32>} : memref<8x1xf32, #tpu.memory_space<vmem>>, vector<8x1xf32>,
      %cst_18 = arith.constant 0.000000e+00 : f32
      %22 = vector.broadcast %cst_18 : f32 to vector<8x1xf32>
      %c0_19 = arith.constant 0 : index
      %c0_20 = arith.constant 0 : index
      %23 = vector.load %arg7[%c0_19, %c0_20] : memref<8x1xf32, #tpu.memory_space<vmem>>, vector<8x1xf32>
      tpu.vector_store %arg7[%c0_19, %c0_20], %22 {strides = array<i32>} : memref<8x1xf32, #tpu.memory_space<vmem>>, vector<8x1xf32>,
    } else {
    }
    %c0 = arith.constant 0 : index
    %c0_1 = arith.constant 0 : index
    %3 = vector.load %arg3[%c0, %c0_1] : memref<8x256xf32, #tpu.memory_space<vmem>>, vector<8x256xf32>
    %c0_2 = arith.constant 0 : index
    %c0_3 = arith.constant 0 : index
    %4 = vector.load %arg4[%c0_2, %c0_3] : memref<8x256xf32, #tpu.memory_space<vmem>>, vector<8x256xf32>
    %c0_4 = arith.constant 0 : index
    %c0_5 = arith.constant 0 : index
    %5 = vector.load %arg6[%c0_4, %c0_5] : memref<8x1xf32, #tpu.memory_space<vmem>>, vector<8x1xf32>
    %6 = arith.mulf %3, %4 : vector<8x256xf32>
    %cst = arith.constant dense<0.000000e+00> : vector<8xf32>
    %7 = vector.multi_reduction <add>, %6, %cst [1] : vector<8x256xf32> to vector<8xf32>
    %8 = vector.shape_cast %7 : vector<8xf32> to vector<8x1xf32>
    %9 = arith.addf %5, %8 : vector<8x1xf32>
    %c0_6 = arith.constant 0 : index
    %c0_7 = arith.constant 0 : index
    %10 = vector.load %arg6[%c0_6, %c0_7] : memref<8x1xf32, #tpu.memory_space<vmem>>, vector<8x1xf32>
    tpu.vector_store %arg6[%c0_6, %c0_7], %9 {strides = array<i32>} : memref<8x1xf32, #tpu.memory_space<vmem>>, vector<8x1xf32>,
    %c0_8 = arith.constant 0 : index
    %c0_9 = arith.constant 0 : index
    %11 = vector.load %arg7[%c0_8, %c0_9] : memref<8x1xf32, #tpu.memory_space<vmem>>, vector<8x1xf32>
    %12 = arith.addf %3, %4 : vector<8x256xf32>
    %cst_10 = arith.constant dense<0.000000e+00> : vector<8xf32>
    %13 = vector.multi_reduction <add>, %12, %cst_10 [1] : vector<8x256xf32> to vector<8xf32>
    %14 = vector.shape_cast %13 : vector<8xf32> to vector<8x1xf32>
    %15 = arith.addf %11, %14 : vector<8x1xf32>
    %c0_11 = arith.constant 0 : index
    %c0_12 = arith.constant 0 : index
    %16 = vector.load %arg7[%c0_11, %c0_12] : memref<8x1xf32, #tpu.memory_space<vmem>>, vector<8x1xf32>
    tpu.vector_store %arg7[%c0_11, %c0_12], %15 {strides = array<i32>} : memref<8x1xf32, #tpu.memory_space<vmem>>, vector<8x1xf32>,
    %c0_i32_13 = arith.constant 0 : i32
    %17 = arith.cmpi eq, %arg2, %c0_i32_13 : i32
    %18 = arith.extui %17 : i1 to i32
    %c0_i32_14 = arith.constant 0 : i32
    %19 = arith.cmpi ne, %18, %c0_i32_14 : i32
    scf.if %19 {
      %20 = tpu.iota {dimensions = array<i32: 1>} : vector<8x128xi32>
      %c0_i32_15 = arith.constant 0 : i32
      %21 = vector.broadcast %c0_i32_15 : i32 to vector<8x128xi32>
      %22 = arith.cmpi eq, %20, %21 : vector<8x128xi32>
      %c0_16 = arith.constant 0 : index
      %c0_17 = arith.constant 0 : index
      %23 = vector.load %arg6[%c0_16, %c0_17] : memref<8x1xf32, #tpu.memory_space<vmem>>, vector<8x1xf32>
      %c1_i32 = arith.constant 1 : i32
      %24 = vector.broadcast %c1_i32 : i32 to vector<8x128xi32>
      %25 = arith.cmpi eq, %20, %24 : vector<8x128xi32>
      %c0_18 = arith.constant 0 : index
      %c0_19 = arith.constant 0 : index
      %26 = vector.load %arg7[%c0_18, %c0_19] : memref<8x1xf32, #tpu.memory_space<vmem>>, vector<8x1xf32>
      %cst_20 = arith.constant 0.000000e+00 : f32
      %27 = vector.shape_cast %26 : vector<8x1xf32> to vector<8x1xf32>
      %28 = vector.broadcast %27 : vector<8x1xf32> to vector<8x128xf32>
      %29 = vector.broadcast %cst_20 : f32 to vector<8x128xf32>
      %30 = arith.select %25, %28, %29 : vector<8x128xi1>, vector<8x128xf32>
      %31 = vector.shape_cast %23 : vector<8x1xf32> to vector<8x1xf32>
      %32 = vector.broadcast %31 : vector<8x1xf32> to vector<8x128xf32>
      %33 = arith.select %22, %32, %30 : vector<8x128xi1>, vector<8x128xf32>
      %c0_21 = arith.constant 0 : index
      %c0_22 = arith.constant 0 : index
      %34 = vector.load %arg5[%c0_21, %c0_22] : memref<8x128xf32, #tpu.memory_space<vmem>>, vector<8x128xf32>
      tpu.vector_store %arg5[%c0_21, %c0_22], %33 {strides = array<i32>} : memref<8x128xf32, #tpu.memory_space<vmem>>, vector<8x128xf32>,
    } else {
    }
    return
  }
  func.func @transform_0(%arg0: i32, %arg1: i32, %arg2: i32) -> (i32, i32) {
    %c1_i32 = arith.constant 1 : i32
    %0 = arith.muli %arg0, %c1_i32 : i32
    %1 = arith.addi %0, %arg2 : i32
    %c0_i32 = arith.constant 0 : i32
    return %arg1, %1 : i32, i32
  }
  func.func @transform_1(%arg0: i32, %arg1: i32, %arg2: i32) -> (i32, i32) {
    %c1_i32 = arith.constant 1 : i32
    %0 = arith.muli %arg0, %c1_i32 : i32
    %1 = arith.addi %0, %arg2 : i32
    %c0_i32 = arith.constant 0 : i32
    return %arg1, %1 : i32, i32
  }
  func.func @transform_2(%arg0: i32, %arg1: i32, %arg2: i32) -> (i32, i32) {
    %c1_i32 = arith.constant 1 : i32
    %0 = arith.muli %arg0, %c1_i32 : i32
    %1 = arith.addi %0, %arg1 : i32
    %c0_i32 = arith.constant 0 : i32
    %c0_i32_0 = arith.constant 0 : i32
    return %1, %c0_i32 : i32, i32
  }
}

</mosaic_0001>

<llo_original>
// kernel: dice_loss.1
$region0: #{dice_loss.1}
  #allocation0 [shape = 'u32[]', space=smem, size = 0x4, offset = 0x4, fixed_abs, tag = 'smem constant byte address 0x4 - core index']
  #allocation1 [shape = 'u32[144,128]{1,0:T(1,128)}', space=vmem, size = 0x12000, scoped, tag = 'internal scratch']
  #allocation2 [shape = 'f32[8,1]{1,0:T(8,128)}', space=vmem, size = 0x1000, scoped, tag = 'scratch operand']
  #allocation3 [shape = 'f32[8,1]{1,0:T(8,128)}', space=vmem, size = 0x1000, scoped, tag = 'scratch operand']
  %s0 = inlined_call_operand.vmem [shape: f32[8,256], index: 0, kind: input, shape index: {}]
  %s1 = inlined_call_operand.vmem [shape: f32[8,256], index: 1, kind: input, shape index: {}]
  %s2 = inlined_call_operand.vmem [shape: f32[8,128], index: 2, kind: output, shape index: {}]
  %s3 = sld [smem:[#allocation0]]
  $region26: #{dice_loss.1} parent=0
    _
  %s5 = ssub.s32 1, %s3
  %s6 = scalar_select 0, %s5, %s3
  // Predicated region
  $region2: #{dice_loss.1} parent=0 // pred_check
    _
  $region3: #{dice_loss.1} parent=0 // pred_check_branch
    %8 = sbr.rel (0) target = $region5
  $region4: #{dice_loss.1} parent=0 // pred_region
    %s9 = sadd.s32 0, 0
    %s10 = smul.u32 2, %s9
    %p11 = scmp.lt.s32.totalorder %s10, 1
    %s12 = scalar_select %p11, %s10, 1
    %s13 = smul.addr %s12, 8
    %s14 = scalar_lea.vmem %s0, %s13
    %s15 = sadd.s32 0, 0
    %s16 = smul.u32 2, %s15
  $region5: #{dice_loss.1} parent=0 // pred_fallthru
    _
  // Predicated region
  $region6: #{dice_loss.1} parent=0 // pred_check
    _
  $region7: #{dice_loss.1} parent=0 // pred_check_branch
    %18 = sbr.rel (0) target = $region9
  $region8: #{dice_loss.1} parent=0 // pred_region
    %s19 = sadd.s32 0, 0
    %s20 = smul.u32 2, %s19
    %p21 = scmp.lt.s32.totalorder %s20, 1
    %s22 = scalar_select %p21, %s20, 1
    %s23 = smul.addr %s22, 8
    %s24 = scalar_lea.vmem %s1, %s23
    %s25 = sadd.s32 0, 0
    %s26 = smul.u32 2, %s25
  $region9: #{dice_loss.1} parent=0 // pred_fallthru
    _
  %s27 = sadd.s32 0, 0
  %s28 = smul.u32 2, %s27
  %p29 = scmp.lt.s32.totalorder %s28, 1
  %s30 = scalar_select %p29, %s28, 1
  %s31 = smul.addr %s30, 8
  %s32 = scalar_lea.vmem %s0, %s31
  %s33 = sadd.s32 0, 0
  %s34 = smul.u32 2, %s33
  %p35 = scmp.lt.s32.totalorder %s34, 1
  %s36 = scalar_select %p35, %s34, 1
  %s37 = smul.addr %s36, 8
  %s38 = scalar_lea.vmem %s1, %s37
  %s39 = sadd.s32 0, 0
  %p40 = scmp.lt.s32.totalorder %s39, 0
  %s41 = scalar_select %p40, %s39, 0
  %s42 = smul.addr %s41, 8
  %s43 = scalar_lea.vmem %s2, %s42
  %s44 = sadd.s32 0, 0
  %s45 = smul.u32 2, %s44
  %p46 = scmp.lt.s32.totalorder %s45, 1
  %s47 = scalar_select %p46, %s45, 1
  %s48 = smul.addr %s47, 8
  %s49 = scalar_lea.vmem %s0, %s48
  %s50 = sadd.s32 0, 0
  %s51 = smul.u32 2, %s50
  %s52 = sadd.s32 0, 0
  %s53 = smul.u32 2, %s52
  %p54 = scmp.lt.s32.totalorder %s53, 1
  %s55 = scalar_select %p54, %s53, 1
  %s56 = smul.addr %s55, 8
  %s57 = scalar_lea.vmem %s1, %s56
  %s58 = sadd.s32 0, 0
  %s59 = smul.u32 2, %s58
  %s60 = sadd.s32 0, 0
  %p61 = scmp.lt.s32.totalorder %s60, 0
  %s62 = scalar_select %p61, %s60, 0
  %s63 = smul.addr %s62, 8
  %s64 = scalar_lea.vmem %s2, %s63
  %s65 = sadd.s32 0, 0
  %p66 = scmp.eq.s32.totalorder 0, 0
  // Predicated region
  $region10: #{dice_loss.1} parent=0 // pred_check
    %p67 = pneg %p66
  $region11: #{dice_loss.1} parent=0 // pred_check_branch
    %69 = sbr.rel (%p67) target = $region13
  $region12: #{dice_loss.1} parent=0 // pred_region
    %vm70 = vcmask 7168
    %71 = vst.msk [vmem:[#allocation2] sm:$0xff] %vm70, 0.0
    %72 = vst.msk [vmem:[#allocation3] sm:$0xff] %vm70, 0.0
  $region13: #{dice_loss.1} parent=0 // pred_fallthru
    _
  %v73 = vld [vmem:[%s49] sm:$0xff]
  %v74 = vld [vmem:[%s49 + $0x8] sm:$0xff]
  %v75 = vld [vmem:[%s57] sm:$0xff]
  %v76 = vld [vmem:[%s57 + $0x8] sm:$0xff]
  %v77 = vld [vmem:[#allocation2] sm:$0xff]
  %v78 = vmul.f32 %v73, %v75
  %v79 = vmul.f32 %v74, %v76
  %v80 = vadd.f32 %v78, %v79
  %81 = vadd.xlane.f32.xlu0 %v80
  %v82 = vpop.xlane.xlu0 %81
  %v83 = vadd.f32 %v77, %v82
  %vm84 = vcmask 7168
  %85 = vst.msk [vmem:[#allocation2] sm:$0xff] %vm84, %v83
  %v86 = vld [vmem:[#allocation3] sm:$0xff]
  %v87 = vadd.f32 %v73, %v75
  %v88 = vadd.f32 %v74, %v76
  %v89 = vadd.f32 %v87, %v88
  %90 = vadd.xlane.f32.xlu0 %v89
  %v91 = vpop.xlane.xlu0 %90
  %v92 = vadd.f32 %v86, %v91
  %93 = vst.msk [vmem:[#allocation3] sm:$0xff] %vm84, %v92
  // Predicated region
  $region14: #{dice_loss.1} parent=0 // pred_check
    %p94 = pneg %p66
  $region15: #{dice_loss.1} parent=0 // pred_check_branch
    %96 = sbr.rel (%p94) target = $region17
  $region16: #{dice_loss.1} parent=0 // pred_region
    %v97 = vlaneseq
    %v98 = vand.u32 %v97, 127
    %vm99 = vcmp.eq.s32.totalorder %v98, 0
    %v100 = vld [vmem:[#allocation2] sm:$0xff]
    %vm101 = vcmp.eq.s32.totalorder %v98, 1
    %v102 = vld [vmem:[#allocation3] sm:$0xff]
    %104 = vset.pattern.permute.xlu0 0
    %105 = vperm.xlu0 %104, %v102
    %v106 = vpop.permute.xlu0 %105
    %v108 = vsel %vm101, %v106, 0.0
    %110 = vset.pattern.permute.xlu0 0
    %111 = vperm.xlu0 %110, %v100
    %v112 = vpop.permute.xlu0 %111
    %v114 = vsel %vm99, %v112, %v108
    %115 = vst [vmem:[%s64] sm:$0xff] %v114
  $region17: #{dice_loss.1} parent=0 // pred_fallthru
    _
  %s116 = sadd.s32 0, 0
  %p117 = scmp.lt.s32.totalorder %s116, 0
  %s118 = scalar_select %p117, %s116, 0
  %s119 = smul.addr %s118, 8
  %s120 = scalar_lea.vmem %s2, %s119
  // Predicated region
  $region18: #{dice_loss.1} parent=0 // pred_check
    _
  $region19: #{dice_loss.1} parent=0 // pred_check_branch
    %122 = sbr.rel (0) target = $region21
  $region20: #{dice_loss.1} parent=0 // pred_region
    %s123 = sadd.s32 0, 0
  $region21: #{dice_loss.1} parent=0 // pred_fallthru
    _
  // Predicated region
  $region22: #{dice_loss.1} parent=0 // pred_check
    _
  $region23: #{dice_loss.1} parent=0 // pred_check_branch
    %125 = sbr.rel (0) target = $region25
  $region24: #{dice_loss.1} parent=0 // pred_region
    %s126 = sadd.s32 0, 0
    %p127 = scmp.lt.s32.totalorder %s126, 0
    %s128 = scalar_select %p127, %s126, 0
    %s129 = smul.addr %s128, 8
    %s130 = scalar_lea.vmem %s2, %s129
  $region25: #{dice_loss.1} parent=0 // pred_fallthru
    _

</llo_original>
